<compile_context>
chip_gen: v7x
topology: tpu7x:2x2x1
jax: 0.10.0
libtpu: 0.0.40
codegen_flags: <defaults>
</compile_context>

<pallas_src>
import functools

import jax
import jax.numpy as jnp
from jax.experimental import pallas as pl
from jax.experimental.pallas import tpu as pltpu

_LANES = 128


def _stenosis_kernel(x_ref, y_out_ref, *, neg_half_inv_l2):
    # x_ref:     (4, tile_r, 128)  channel rows: [x_ref, y_ref, A, sigma]
    # y_out_ref: (tile_r, 128)     y_case only
    xr = x_ref[0].astype(jnp.float32)
    yr = x_ref[1].astype(jnp.float32)
    amp = x_ref[2].astype(jnp.float32)
    sigma = x_ref[3].astype(jnp.float32)

    # 1/sigma^2: approximate EUP reciprocal + two Newton steps (VALU has slack
    # in this memory-bound kernel; accuracy back to ~f32 so exp(arg) stays tight).
    s2 = sigma * sigma
    r0 = pl.reciprocal(s2, approx=True)
    r0 = r0 * (2.0 - s2 * r0)
    inv_s2 = r0 * (2.0 - s2 * r0)

    # -(x/l)^2 / (2*sigma^2)  ==  (-0.5/l^2) * (x*x) * (1/sigma^2)
    expo = (neg_half_inv_l2 * (xr * xr)) * inv_s2
    y_case = yr * (1.0 - (amp * 20.0) * jnp.exp(expo))

    y_out_ref[...] = y_case.astype(y_out_ref.dtype)


def stenosis_forward(x, *, r=0.1, l=1.0, tile_r=4096,
                     vmem_limit_bytes=48 * 1024 * 1024,
                     allow_input_fusion=True):
    """x: (..., 4) array -> (..., 2), matching Stenosis.forward."""
    del r  # buffer `r` is registered on the module but unused in forward
    assert x.shape[-1] == 4, "last dim must hold (x_ref, y_ref, A, sigma)"
    lead_shape = x.shape[:-1]
    dtype = x.dtype

    n = 1
    for d in lead_shape:
        n *= d

    rows = pl.cdiv(n, _LANES)

    # Balanced tiling: never produce a nearly-empty trailing block, and keep
    # interior blocks sublane-aligned (multiple of 8 rows).
    num_blocks = pl.cdiv(rows, max(int(tile_r), 8))
    tile_r_eff = ((pl.cdiv(rows, num_blocks) + 7) // 8) * 8
    rows_pad = num_blocks * tile_r_eff
    n_pad = rows_pad * _LANES

    # Pad the ragged tail *before* the transpose so pad + transpose fuse into a
    # single producer (value 1.0 keeps the discarded padded region finite).
    xf = x.reshape(n, 4)
    if n_pad != n:
        xf = jnp.pad(xf, ((0, n_pad - n), (0, 0)), constant_values=1.0)
    # Channels-first slab in the caller dtype (no f32 upcast in HBM). With
    # allow_input_fusion this producer can fuse into the kernel's input DMA.
    xc = jnp.transpose(xf).reshape(4, rows_pad, _LANES)

    kernel = functools.partial(
        _stenosis_kernel, neg_half_inv_l2=float(-0.5 / (float(l) ** 2)))

    itemsize = jnp.dtype(dtype).itemsize
    cost = pl.CostEstimate(
        flops=14 * n_pad,
        transcendentals=2 * n_pad,                      # exp + approx recip
        bytes_accessed=5 * n_pad * itemsize,            # 4 channels in, 1 out
    )

    y_case = pl.pallas_call(
        kernel,
        out_shape=jax.ShapeDtypeStruct((rows_pad, _LANES), dtype),
        grid_spec=pltpu.PrefetchScalarGridSpec(
            num_scalar_prefetch=0,
            grid=(num_blocks,),
            in_specs=[pl.BlockSpec((4, tile_r_eff, _LANES), lambda i: (0, i, 0))],
            out_specs=pl.BlockSpec((tile_r_eff, _LANES), lambda i: (i, 0)),
        ),
        compiler_params=pltpu.CompilerParams(
            dimension_semantics=("parallel",),
            vmem_limit_bytes=int(vmem_limit_bytes),
            allow_input_fusion=[True] if allow_input_fusion else None,
        ),
        cost_estimate=cost,
    )(xc)

    y_case = y_case.reshape(n_pad)[:n].reshape(lead_shape + (1,))
    # channel 0 is a pure passthrough of x[..., 0:1]; reassembled here so the
    # kernel only writes y_case (slice + concat fuse into one epilogue pass).
    return jnp.concatenate([x[..., 0:1], y_case], axis=-1)


def _reference(x, l):
    x_ref = x[..., 0:1]
    y_ref = x[..., 1:2]
    A = x[..., 2:3]
    sigma = x[..., 3:4]
    y_case = y_ref * (1.0 - A / 0.05 *
                      jnp.exp(-1.0 * (x_ref / l) ** 2.0 / (2.0 * sigma ** 2.0)))
    return jnp.concatenate((x_ref, y_case), axis=-1)


if __name__ == "__main__":
    key = jax.random.PRNGKey(0)
    r_val, l_val = 0.1, 1.0  # deterministic buffer values

    # Test 1: small point-cloud-style batch (B, H, W, 4).
    B, H, W = 2, 16, 16
    k1, k2, k3, k4 = jax.random.split(key, 4)
    x = jax.random.normal(k1, (B, H, W, 4), dtype=jnp.float32)
    sigma = 0.5 + jax.random.uniform(k2, (B, H, W, 1), dtype=jnp.float32)
    x = x.at[..., 3:4].set(sigma)  # keep sigma away from zero (squared denom)

    out = jax.block_until_ready(stenosis_forward(x, r=r_val, l=l_val))
    ref = _reference(x, l_val)
    assert out.shape == (B, H, W, 2), out.shape
    assert jnp.allclose(out, ref, atol=1e-5, rtol=1e-5), "mismatch vs reference (test 1)"

    # Test 2: ragged shape + multi-block grid (exercises padding + balancing).
    x2 = jax.random.normal(k3, (3, 50, 7, 4), dtype=jnp.float32)
    sigma2 = 0.5 + jax.random.uniform(k4, (3, 50, 7, 1), dtype=jnp.float32)
    x2 = x2.at[..., 3:4].set(sigma2)

    out2 = jax.block_until_ready(stenosis_forward(x2, r=r_val, l=l_val, tile_r=8))
    ref2 = _reference(x2, l_val)
    assert out2.shape == (3, 50, 7, 2), out2.shape
    assert jnp.allclose(out2, ref2, atol=1e-5, rtol=1e-5), "mismatch vs reference (test 2)"

    print("KERNEL_OK")
</pallas_src>

<mosaic_0001>
module attributes {stable_mosaic.version = 11 : i64} {
  func.func @_stenosis_kernel(%arg0: i32, %arg1: memref<4x8x128xf32, #tpu.memory_space<vmem>>, %arg2: memref<8x128xf32, #tpu.memory_space<vmem>>) attributes {dimension_semantics = [#tpu.dimension_semantics<parallel>], iteration_bounds = array<i64: 1>, scalar_prefetch = 0 : i64, scratch_operands = 0 : i64, tpu.core_type = #tpu.core_type<tc>, window_params = [{transform_indices = @transform_0, window_bounds = array<i64: 4, 8, 128>}, {transform_indices = @transform_1, window_bounds = array<i64: 8, 128>}]} {
    %c0 = arith.constant 0 : index
    %c0_0 = arith.constant 0 : index
    %c0_1 = arith.constant 0 : index
    %0 = vector.load %arg1[%c0, %c0_0, %c0_1] : memref<4x8x128xf32, #tpu.memory_space<vmem>>, vector<1x8x128xf32>
    %1 = vector.shape_cast %0 : vector<1x8x128xf32> to vector<8x128xf32>
    %c1 = arith.constant 1 : index
    %c0_2 = arith.constant 0 : index
    %c0_3 = arith.constant 0 : index
    %2 = vector.load %arg1[%c1, %c0_2, %c0_3] : memref<4x8x128xf32, #tpu.memory_space<vmem>>, vector<1x8x128xf32>
    %3 = vector.shape_cast %2 : vector<1x8x128xf32> to vector<8x128xf32>
    %c2 = arith.constant 2 : index
    %c0_4 = arith.constant 0 : index
    %c0_5 = arith.constant 0 : index
    %4 = vector.load %arg1[%c2, %c0_4, %c0_5] : memref<4x8x128xf32, #tpu.memory_space<vmem>>, vector<1x8x128xf32>
    %5 = vector.shape_cast %4 : vector<1x8x128xf32> to vector<8x128xf32>
    %c3 = arith.constant 3 : index
    %c0_6 = arith.constant 0 : index
    %c0_7 = arith.constant 0 : index
    %6 = vector.load %arg1[%c3, %c0_6, %c0_7] : memref<4x8x128xf32, #tpu.memory_space<vmem>>, vector<1x8x128xf32>
    %7 = vector.shape_cast %6 : vector<1x8x128xf32> to vector<8x128xf32>
    %8 = arith.mulf %7, %7 : vector<8x128xf32>
    %9 = tpu.reciprocal %8 {approx = true} : vector<8x128xf32> -> vector<8x128xf32>
    %10 = arith.mulf %8, %9 : vector<8x128xf32>
    %cst = arith.constant 2.000000e+00 : f32
    %11 = vector.broadcast %cst : f32 to vector<8x128xf32>
    %12 = arith.subf %11, %10 : vector<8x128xf32>
    %13 = arith.mulf %9, %12 : vector<8x128xf32>
    %14 = arith.mulf %8, %13 : vector<8x128xf32>
    %cst_8 = arith.constant 2.000000e+00 : f32
    %15 = vector.broadcast %cst_8 : f32 to vector<8x128xf32>
    %16 = arith.subf %15, %14 : vector<8x128xf32>
    %17 = arith.mulf %13, %16 : vector<8x128xf32>
    %18 = arith.mulf %1, %1 : vector<8x128xf32>
    %cst_9 = arith.constant -5.000000e-01 : f32
    %19 = vector.broadcast %cst_9 : f32 to vector<8x128xf32>
    %20 = arith.mulf %19, %18 : vector<8x128xf32>
    %21 = arith.mulf %20, %17 : vector<8x128xf32>
    %cst_10 = arith.constant 2.000000e+01 : f32
    %22 = vector.broadcast %cst_10 : f32 to vector<8x128xf32>
    %23 = arith.mulf %5, %22 : vector<8x128xf32>
    %24 = math.exp %21 : vector<8x128xf32>
    %25 = arith.mulf %23, %24 : vector<8x128xf32>
    %cst_11 = arith.constant 1.000000e+00 : f32
    %26 = vector.broadcast %cst_11 : f32 to vector<8x128xf32>
    %27 = arith.subf %26, %25 : vector<8x128xf32>
    %28 = arith.mulf %3, %27 : vector<8x128xf32>
    %c0_12 = arith.constant 0 : index
    %c0_13 = arith.constant 0 : index
    %29 = vector.load %arg2[%c0_12, %c0_13] : memref<8x128xf32, #tpu.memory_space<vmem>>, vector<8x128xf32>
    tpu.vector_store %arg2[%c0_12, %c0_13], %28 {strides = array<i32>} : memref<8x128xf32, #tpu.memory_space<vmem>>, vector<8x128xf32>,
    return
  }
  func.func @transform_0(%arg0: i32) -> (i32, i32, i32) {
    %c0_i32 = arith.constant 0 : i32
    %c0_i32_0 = arith.constant 0 : i32
    %c0_i32_1 = arith.constant 0 : i32
    return %c0_i32, %arg0, %c0_i32_0 : i32, i32, i32
  }
  func.func @transform_1(%arg0: i32) -> (i32, i32) {
    %c0_i32 = arith.constant 0 : i32
    %c0_i32_0 = arith.constant 0 : i32
    return %arg0, %c0_i32 : i32, i32
  }
}

</mosaic_0001>

<llo_original>
// kernel: tpu_custom_call.1
$region0: #{tpu_custom_call.1}
  #allocation0 [shape = 'u32[]', space=smem, size = 0x4, offset = 0x4, fixed_abs, tag = 'smem constant byte address 0x4 - core index']
  #allocation1 [shape = 'u32[144,128]{1,0:T(1,128)}', space=vmem, size = 0x12000, scoped, tag = 'internal scratch']
  %s0 = inlined_call_operand.hbm [shape: f32[4,8,128], index: 0, kind: input, shape index: {}]
  %s1 = inlined_call_operand.hbm [shape: f32[8,128], index: 1, kind: output, shape index: {}]
  %s2 = sld [smem:[#allocation0]]
  $region18: #{tpu_custom_call.1} parent=0
    _
  %s4 = ssub.s32 1, %s2
  %s5 = scalar_select 0, %s4, %s2
  $region1: #{tpu_custom_call.1} parent=0
    #allocation2 [shape = 'u8[16384]{0}', space=vmem, size = 0x4000, scoped, tag = 'input window, operand 0, single buffered']
    #allocation3 [shape = 's32[1]{0}', space=sflag, size = 0x4, scoped, tag = 'scoped memory for tpu_custom_call.1']
    #allocation4 [shape = 's32[1]{0}', space=sflag, size = 0x4, scoped, tag = 'scoped memory for tpu_custom_call.1']
    #allocation5 [shape = 'u8[4096]{0}', space=vmem, size = 0x1000, scoped, tag = 'output window, operand 0, single buffered']
    %6 = vsyncpa [#allocation3], 0
    %7 = vsyncpa [#allocation4], 0
    // Predicated region
    $region2: #{tpu_custom_call.1} parent=1 // pred_check
      _
    $region3: #{tpu_custom_call.1} parent=1 // pred_check_branch
      %9 = sbr.rel (0) target = $region5
    $region4: #{tpu_custom_call.1} parent=1 // pred_region
      %s11 = ssub.s32 512, 512
      %12 = vsyncadd [#allocation3], %s11
      %s13 = sshll.u32 [#allocation2], 4
      %s14 = int_to_ptr.vmem [resolvable:$true] %s13
      %19 = dma.hbm_to_vmem [thread:$0]  %s0, 512, %s14, [#allocation3], 128, 128, 8
    $region5: #{tpu_custom_call.1} parent=1 // pred_fallthru
      _
    // Predicated region
    $region6: #{tpu_custom_call.1} parent=1 // pred_check
      _
    $region7: #{tpu_custom_call.1} parent=1 // pred_check_branch
      %21 = sbr.rel (0) target = $region9
    $region8: #{tpu_custom_call.1} parent=1 // pred_region
      %22 = dma.done [#allocation3], 512
    $region9: #{tpu_custom_call.1} parent=1 // pred_fallthru
      _
    %v23 = vld [vmem:[#allocation2] sm:$0xff]
    %s24 = scalar_lea.vmem [#allocation2], 8
    %v25 = vld [vmem:[%s24] sm:$0xff]
    %s26 = scalar_lea.vmem [#allocation2], 16
    %v27 = vld [vmem:[%s26] sm:$0xff]
    %s28 = scalar_lea.vmem [#allocation2], 24
    %v29 = vld [vmem:[%s28] sm:$0xff]
    %v30 = vmul.f32 %v29, %v29
    %v31 = vrcp.pop %v30
    %v32 = vmul.f32 %v30, %v31
    %v33 = vsub.f32 2.0, %v32
    %v34 = vmul.f32 %v31, %v33
    %v35 = vmul.f32 %v30, %v34
    %v36 = vsub.f32 2.0, %v35
    %v37 = vmul.f32 %v34, %v36
    %v38 = vmul.f32 %v23, %v23
    %v39 = vmul.f32 %v38, -0.5
    %v40 = vmul.f32 %v39, %v37
    %v41 = vmul.f32 %v27, 20.0
    %v42 = vmul.f32 %v40, 1.442695
    %v43 = vpow.pop %v42
    %v44 = vmul.f32 %v41, %v43
    %v45 = vsub.f32 1.0, %v44
    %v46 = vmul.f32 %v25, %v45
    %47 = vst [vmem:[#allocation5] sm:$0xff] %v46
    // Predicated region
    $region10: #{tpu_custom_call.1} parent=1 // pred_check
      _
    $region11: #{tpu_custom_call.1} parent=1 // pred_check_branch
      %49 = sbr.rel (0) target = $region13
    $region12: #{tpu_custom_call.1} parent=1 // pred_region
      %s51 = ssub.s32 128, 128
      %52 = vsyncadd [#allocation4], %s51
      %s54 = sshll.u32 [#allocation5], 4
      %s55 = int_to_ptr.vmem [resolvable:$true] %s54
      %57 = dma.vmem_to_hbm [thread:$0]  %s55, 128, %s1, [#allocation4]
    $region13: #{tpu_custom_call.1} parent=1 // pred_fallthru
      _
    // Predicated region
    $region14: #{tpu_custom_call.1} parent=1 // pred_check
      _
    $region15: #{tpu_custom_call.1} parent=1 // pred_check_branch
      %59 = sbr.rel (0) target = $region17
    $region16: #{tpu_custom_call.1} parent=1 // pred_region
      %60 = dma.done [#allocation4], 128
    $region17: #{tpu_custom_call.1} parent=1 // pred_fallthru
      _
    %61 = vsyncpa [#allocation3], 1
    %62 = vsyncpa [#allocation4], 1

</llo_original>
